<compile_context>
chip_gen: v7x
topology: tpu7x:2x2x1
jax: 0.10.0
libtpu: 0.0.40
codegen_flags: <defaults>
</compile_context>

<pallas_src>
import math
import functools

import jax
import jax.numpy as jnp
from jax.experimental import pallas as pl
from jax.experimental.pallas import tpu as pltpu


def _round_up(x, m):
    return (x + m - 1) // m * m


def _make_kernel(max_n, n_pad_rows):
    """max_n: number of harmonics. n_pad_rows: zero rows appended to reach K2p."""

    def kernel(t_ref, abc_ref, coefh_ref, c0_ref, o_ref):
        # t_ref:     (1, TN)      flattened time lags (lag slow, seq fast), zero padded
        # abc_ref:   (1, 3, TN)   rows = [a, b, c * 2*pi/T] flattened per batch
        # coefh_ref: (Cp, K2p)    interleaved [sin_1, cos_1, ..., sin_maxN, cos_maxN]
        #                         coefficients, pre-scaled by 1/sqrt(T/2), zero padded
        # c0_ref:    (Cp, 1)      constant-basis coefficients pre-scaled by phi0(T)
        # o_ref:     (1, Cp, TN)
        abc = abc_ref[0]                              # (3, TN)
        a_v = abc[0:1, :]                             # (1, TN)
        b_v = abc[1:2, :]
        w_v = abc[2:3, :]                             # c * 2*pi/T

        theta = w_v * (t_ref[...] - b_v)              # (1, TN) base angle

        # Only EUP work in the kernel: sin/cos of the base angle.
        s1 = jnp.sin(theta)
        c1 = jnp.cos(theta)

        # Chebyshev / angle-addition recurrence on stacked [sin; cos] pairs:
        #   r_n = 2*cos(theta) * r_{n-1} - r_{n-2}
        r1 = jnp.concatenate([s1, c1], axis=0)                               # (2, TN)
        r0 = jnp.concatenate([jnp.zeros_like(s1), jnp.ones_like(c1)], axis=0)
        two_c1 = 2.0 * c1                                                    # (1, TN)

        rows = [r1]
        r_prev, r_cur = r0, r1
        for _ in range(max_n - 1):
            r_nxt = two_c1 * r_cur - r_prev            # VPU FMAs, broadcast over sublanes
            rows.append(r_nxt)
            r_prev, r_cur = r_cur, r_nxt
        if n_pad_rows > 0:
            rows.append(jnp.zeros((n_pad_rows, s1.shape[1]), jnp.float32))
        basis = jnp.concatenate(rows, axis=0)          # (K2p, TN) = [s1,c1,s2,c2,...]

        # Single fused MXU contraction over all sin+cos harmonics.
        acc = jnp.dot(coefh_ref[...], basis, preferred_element_type=jnp.float32)  # (Cp, TN)
        acc = acc + c0_ref[...]                        # constant term, lane-broadcast (Cp,1)
        o_ref[0] = (a_v * acc).astype(o_ref.dtype)     # broadcast a over channel rows

    return kernel


def fourier_basis_trf_forward(a, b, c, coefs, tmin_idx, tmax_idx, timeshift_idx):
    """a, b, c: (B, 1, 1, 1, S) float32.  coefs: (nOut, nIn, nBasis) float32 (nBasis odd).

    Returns (B, nOut, nIn, L, S) with L = tmax_idx - tmin_idx + 1, matching PyTorch.
    """
    n_out, n_in, n_basis = coefs.shape
    assert n_basis % 2 == 1, "Fourier basis: 1 constant + maxN sin + maxN cos"
    max_n = n_basis // 2
    assert max_n >= 1

    L = tmax_idx - tmin_idx + 1                       # time_embedding length
    n_win_ext = L + 2 * timeshift_idx                 # time_embedding_ext length
    T = n_win_ext - 1                                 # Fourier period

    B = a.shape[0]
    S = a.shape[-1]
    N = L * S
    C = n_out * n_in

    Cp = _round_up(C, 8)
    K2 = 2 * max_n
    K2p = _round_up(K2, 8)

    # --- N tiling: lane-dense tiles that divide the padded N exactly ----------
    Npad = _round_up(N, 128)
    TN = 128
    for cand in (2048, 1024, 512, 256):
        if Npad % cand == 0:
            TN = cand
            break
    J = Npad // TN

    omega = 2.0 * math.pi / float(T)
    scale = 1.0 / math.sqrt(float(T) / 2.0)                       # 1/sqrt(T/2)
    const0 = 1.0 / (math.sqrt(2.0) * math.sqrt(float(T) / 2.0))   # phi0(T)

    # --- host-side glue: flatten / pack / fold constants -----------------------
    t = jnp.arange(tmin_idx, tmax_idx + 1, dtype=jnp.float32)     # (L,)
    tflat = jnp.repeat(t, S)                                      # flat idx = l*S + s
    tflat = jnp.pad(tflat, (0, Npad - N)).reshape(1, Npad)

    def flat_param(p):
        p2 = p.reshape(B, 1, S).astype(jnp.float32)
        return jnp.broadcast_to(p2, (B, L, S)).reshape(B, N)

    abc = jnp.stack([flat_param(a), flat_param(b), flat_param(c) * omega], axis=1)
    abc = jnp.pad(abc, ((0, 0), (0, 0), (0, Npad - N)))           # (B, 3, Npad)

    coefs_flat = coefs.reshape(C, n_basis).astype(jnp.float32)
    c0 = coefs_flat[:, 0:1] * const0                              # (C, 1)
    ch = coefs_flat[:, 1:] * scale                                # (C, 2*maxN) interleaved sin/cos
    c0 = jnp.pad(c0, ((0, Cp - C), (0, 0)))
    ch = jnp.pad(ch, ((0, Cp - C), (0, K2p - K2)))

    kernel = _make_kernel(max_n, K2p - K2)

    out_flat = pl.pallas_call(
        kernel,
        out_shape=jax.ShapeDtypeStruct((B, Cp, Npad), jnp.float32),
        grid=(B, J),
        in_specs=[
            pl.BlockSpec((1, TN), lambda i, j: (0, j)),           # flattened time lags
            pl.BlockSpec((1, 3, TN), lambda i, j: (i, 0, j)),     # packed a/b/c
            pl.BlockSpec((Cp, K2p), lambda i, j: (0, 0)),         # harmonic coefficients
            pl.BlockSpec((Cp, 1), lambda i, j: (0, 0)),           # constant coefficients
        ],
        out_specs=pl.BlockSpec((1, Cp, TN), lambda i, j: (i, 0, j)),
        compiler_params=pltpu.CompilerParams(
            dimension_semantics=("parallel", "parallel")),
    )(tflat, abc, ch, c0)

    return out_flat[:, :C, :N].reshape(B, n_out, n_in, L, S)


def reference_forward(a, b, c, coefs, tmin_idx, tmax_idx, timeshift_idx):
    """Pure-JAX mirror of the PyTorch forward (for validation)."""
    n_out, n_in, n_basis = coefs.shape
    max_n = n_basis // 2
    L = tmax_idx - tmin_idx + 1
    T = (L + 2 * timeshift_idx) - 1

    time_emb = jnp.arange(tmin_idx, tmax_idx + 1, dtype=jnp.float32).reshape(1, 1, 1, L, 1)
    x = c * (time_emb - b)                              # (B,1,1,L,S)
    t = x[..., None]                                    # (B,1,1,L,S,1)
    seq_n = jnp.arange(1, max_n + 1, dtype=jnp.float32)
    ang = 2.0 * jnp.pi * t * seq_n / T                  # (B,1,1,L,S,maxN)
    scale = 1.0 / (T / 2.0) ** 0.5
    const_sin = jnp.sin(ang) * scale
    const_cos = jnp.cos(ang) * scale
    const_n = jnp.stack([const_sin, const_cos], axis=-1).reshape(
        *const_sin.shape[:5], 2 * max_n)                # interleaved sin/cos
    const0 = 1.0 / (2.0 ** 0.5 * (T / 2.0) ** 0.5)
    coefs_b = coefs[:, :, None, None, :]                # (O,I,1,1,nBasis)
    out = const0 * coefs_b[..., 0] + (const_n * coefs_b[..., 1:]).sum(-1)
    return a * out                                      # (B,O,I,L,S)


if __name__ == "__main__":
    # module config (small, deterministic)
    n_in_chan, n_out_chan = 2, 3
    tmin_idx, tmax_idx = 0, 15          # time_embedding length L = 16
    timeshift_idx = 8                   # nWin_ext = 32, T = 31
    n_basis = 9                         # 1 constant + 4 sin + 4 cos
    batch, seq = 2, 8

    key = jax.random.PRNGKey(0)
    k1, k2, k3, k4 = jax.random.split(key, 4)
    coefs = jax.random.uniform(k1, (n_out_chan, n_in_chan, n_basis),
                               jnp.float32, minval=-0.5, maxval=0.5)
    a = jax.random.uniform(k2, (batch, 1, 1, 1, seq), jnp.float32, minval=0.5, maxval=1.5)
    b = jax.random.uniform(k3, (batch, 1, 1, 1, seq), jnp.float32, minval=-2.0, maxval=2.0)
    c = jax.random.uniform(k4, (batch, 1, 1, 1, seq), jnp.float32, minval=0.5, maxval=1.5)

    fwd = jax.jit(functools.partial(
        fourier_basis_trf_forward,
        tmin_idx=tmin_idx, tmax_idx=tmax_idx, timeshift_idx=timeshift_idx))
    out = fwd(a, b, c, coefs)
    out = jax.block_until_ready(out)

    ref = reference_forward(a, b, c, coefs, tmin_idx, tmax_idx, timeshift_idx)
    ref = jax.block_until_ready(ref)

    assert out.shape == (batch, n_out_chan, n_in_chan, tmax_idx - tmin_idx + 1, seq), out.shape
    assert jnp.allclose(out, ref, rtol=2e-4, atol=2e-4), float(jnp.max(jnp.abs(out - ref)))
    print("KERNEL_OK")
</pallas_src>

<mosaic_0001>
module attributes {stable_mosaic.version = 11 : i64} {
  func.func @kernel(%arg0: i32, %arg1: i32, %arg2: memref<1x128xf32, #tpu.memory_space<vmem>>, %arg3: memref<1x3x128xf32, #tpu.memory_space<vmem>>, %arg4: memref<8x8xf32, #tpu.memory_space<vmem>>, %arg5: memref<8x1xf32, #tpu.memory_space<vmem>>, %arg6: memref<1x8x128xf32, #tpu.memory_space<vmem>>) attributes {dimension_semantics = [#tpu.dimension_semantics<parallel>, #tpu.dimension_semantics<parallel>], iteration_bounds = array<i64: 2, 1>, scalar_prefetch = 0 : i64, scratch_operands = 0 : i64, tpu.core_type = #tpu.core_type<tc>, window_params = [{transform_indices = @transform_0, window_bounds = array<i64: 1, 128>}, {transform_indices = @transform_1, window_bounds = array<i64: 1, 3, 128>}, {pipeline_mode = #tpu.pipeline_mode<synchronous>, transform_indices = @transform_2, window_bounds = array<i64: 8, 8>}, {pipeline_mode = #tpu.pipeline_mode<synchronous>, transform_indices = @transform_3, window_bounds = array<i64: 8, 1>}, {transform_indices = @transform_4, window_bounds = array<i64: 1, 8, 128>}]} {
    %c0 = arith.constant 0 : index
    %c0_0 = arith.constant 0 : index
    %c0_1 = arith.constant 0 : index
    %0 = vector.load %arg3[%c0, %c0_0, %c0_1] : memref<1x3x128xf32, #tpu.memory_space<vmem>>, vector<1x3x128xf32>
    %1 = vector.shape_cast %0 : vector<1x3x128xf32> to vector<3x128xf32>
    %2 = vector.extract_strided_slice %1 {offsets = [0, 0], sizes = [1, 128], strides = [1, 1]} : vector<3x128xf32> to vector<1x128xf32>
    %3 = vector.extract_strided_slice %1 {offsets = [1, 0], sizes = [1, 128], strides = [1, 1]} : vector<3x128xf32> to vector<1x128xf32>
    %4 = vector.extract_strided_slice %1 {offsets = [2, 0], sizes = [1, 128], strides = [1, 1]} : vector<3x128xf32> to vector<1x128xf32>
    %c0_2 = arith.constant 0 : index
    %c0_3 = arith.constant 0 : index
    %5 = vector.load %arg2[%c0_2, %c0_3] : memref<1x128xf32, #tpu.memory_space<vmem>>, vector<1x128xf32>
    %6 = arith.subf %5, %3 : vector<1x128xf32>
    %7 = arith.mulf %4, %6 : vector<1x128xf32>
    %8 = math.sin %7 : vector<1x128xf32>
    %9 = math.cos %7 : vector<1x128xf32>
    %10 = tpu.concatenate %8, %9 in 0 : vector<1x128xf32>, vector<1x128xf32> -> vector<2x128xf32>
    %cst = arith.constant 0.000000e+00 : f32
    %11 = vector.broadcast %cst : f32 to vector<1x128xf32>
    %cst_4 = arith.constant 1.000000e+00 : f32
    %12 = vector.broadcast %cst_4 : f32 to vector<1x128xf32>
    %13 = tpu.concatenate %11, %12 in 0 : vector<1x128xf32>, vector<1x128xf32> -> vector<2x128xf32>
    %cst_5 = arith.constant 2.000000e+00 : f32
    %14 = vector.broadcast %cst_5 : f32 to vector<1x128xf32>
    %15 = arith.mulf %14, %9 : vector<1x128xf32>
    %16 = vector.broadcast %15 : vector<1x128xf32> to vector<2x128xf32>
    %17 = arith.mulf %16, %10 : vector<2x128xf32>
    %18 = arith.subf %17, %13 : vector<2x128xf32>
    %19 = vector.broadcast %15 : vector<1x128xf32> to vector<2x128xf32>
    %20 = arith.mulf %19, %18 : vector<2x128xf32>
    %21 = arith.subf %20, %10 : vector<2x128xf32>
    %22 = vector.broadcast %15 : vector<1x128xf32> to vector<2x128xf32>
    %23 = arith.mulf %22, %21 : vector<2x128xf32>
    %24 = arith.subf %23, %18 : vector<2x128xf32>
    %25 = tpu.concatenate %10, %18, %21, %24 in 0 : vector<2x128xf32>, vector<2x128xf32>, vector<2x128xf32>, vector<2x128xf32> -> vector<8x128xf32>
    %c0_6 = arith.constant 0 : index
    %c0_7 = arith.constant 0 : index
    %26 = vector.load %arg4[%c0_6, %c0_7] : memref<8x8xf32, #tpu.memory_space<vmem>>, vector<8x8xf32>
    %cst_8 = arith.constant dense<0.000000e+00> : vector<8x128xf32>
    %27 = tpu.matmul %26, %25, %cst_8 {dimension_numbers = #tpu.dot_dimension_numbers<[1], [0], [0], [1], [0, 0, 1, 1], [], []>} : vector<8x8xf32>, vector<8x128xf32>, vector<8x128xf32> -> vector<8x128xf32>
    %c0_9 = arith.constant 0 : index
    %c0_10 = arith.constant 0 : index
    %28 = vector.load %arg5[%c0_9, %c0_10] : memref<8x1xf32, #tpu.memory_space<vmem>>, vector<8x1xf32>
    %29 = vector.broadcast %28 : vector<8x1xf32> to vector<8x128xf32>
    %30 = arith.addf %27, %29 : vector<8x128xf32>
    %31 = vector.broadcast %2 : vector<1x128xf32> to vector<8x128xf32>
    %32 = arith.mulf %31, %30 : vector<8x128xf32>
    %c0_11 = arith.constant 0 : index
    %c0_12 = arith.constant 0 : index
    %c0_13 = arith.constant 0 : index
    %33 = vector.load %arg6[%c0_11, %c0_12, %c0_13] : memref<1x8x128xf32, #tpu.memory_space<vmem>>, vector<1x8x128xf32>
    %34 = vector.shape_cast %33 : vector<1x8x128xf32> to vector<8x128xf32>
    %35 = vector.shape_cast %32 : vector<8x128xf32> to vector<1x8x128xf32>
    tpu.vector_store %arg6[%c0_11, %c0_12, %c0_13], %35 {strides = array<i32>} : memref<1x8x128xf32, #tpu.memory_space<vmem>>, vector<1x8x128xf32>,
    return
  }
  func.func @transform_0(%arg0: i32, %arg1: i32) -> (i32, i32) {
    %c0_i32 = arith.constant 0 : i32
    %c0_i32_0 = arith.constant 0 : i32
    return %c0_i32, %arg1 : i32, i32
  }
  func.func @transform_1(%arg0: i32, %arg1: i32) -> (i32, i32, i32) {
    %c0_i32 = arith.constant 0 : i32
    %c0_i32_0 = arith.constant 0 : i32
    return %arg0, %c0_i32, %arg1 : i32, i32, i32
  }
  func.func @transform_2(%arg0: i32, %arg1: i32) -> (i32, i32) {
    %c0_i32 = arith.constant 0 : i32
    %c0_i32_0 = arith.constant 0 : i32
    %c0_i32_1 = arith.constant 0 : i32
    return %c0_i32, %c0_i32_0 : i32, i32
  }
  func.func @transform_3(%arg0: i32, %arg1: i32) -> (i32, i32) {
    %c0_i32 = arith.constant 0 : i32
    %c0_i32_0 = arith.constant 0 : i32
    %c0_i32_1 = arith.constant 0 : i32
    return %c0_i32, %c0_i32_0 : i32, i32
  }
  func.func @transform_4(%arg0: i32, %arg1: i32) -> (i32, i32, i32) {
    %c0_i32 = arith.constant 0 : i32
    %c0_i32_0 = arith.constant 0 : i32
    return %arg0, %c0_i32, %arg1 : i32, i32, i32
  }
}

</mosaic_0001>

<llo_original>
// kernel: fourier_basis_trf_forward.1
$region0: #{fourier_basis_trf_forward.1}
  #allocation0 [shape = 'u32[]', space=smem, size = 0x4, offset = 0x4, fixed_abs, tag = 'smem constant byte address 0x4 - core index']
  #allocation1 [shape = 'u32[144,128]{1,0:T(1,128)}', space=vmem, size = 0x12000, scoped, tag = 'internal scratch']
  %s0 = inlined_call_operand.vmem [shape: f32[1,128], index: 0, kind: input, shape index: {}]
  %s1 = inlined_call_operand.vmem [shape: f32[2,3,128], index: 1, kind: input, shape index: {}]
  %s2 = inlined_call_operand.vmem [shape: f32[8,8], index: 2, kind: input, shape index: {}]
  %s3 = inlined_call_operand.vmem [shape: f32[8,1], index: 3, kind: input, shape index: {}]
  %s4 = inlined_call_operand.vmem [shape: f32[2,8,128], index: 4, kind: output, shape index: {}]
  %s5 = sld [smem:[#allocation0]]
  $region49: #{fourier_basis_trf_forward.1} parent=0
    _
  %s7 = ssub.s32 1, %s5
  %s8 = scalar_select 0, %s7, %s5
  loop: start=0, step=1, limit=4
  $region2: #{fourier_basis_trf_forward.1} parent=0 // loop_pre_header
    _
  $region3: #{fourier_basis_trf_forward.1} parent=0 // loop_header
    %s10 = sphi 0, %s14
    %p11 = scmp.ge.s32.totalorder %s10, 4
    %s17 = sphi 0, %s29
    %s18 = sphi 0, %s25
    %s19 = sphi 0, %s17
    %s20 = sphi 0, %s18
    %s21 = sphi 0, %s19
    %s22 = sphi 0, %s20
    %s32 = sphi 0, %s34
    %s35 = sphi 0, %s32
    %s36 = sphi 0, %s35
    %s52 = sphi 0, %s36
    %s60 = sphi 0, %s62
    %s63 = sphi 0, %s60
    %s64 = sphi 0, %s63
    %s80 = sphi 0, %s64
    %s84 = sphi 0, %s84
    %s86 = sphi 0, %s84
    %s87 = sphi 0, %s86
    %s101 = sphi 0, %s87
    %s105 = sphi 0, %s105
    %s107 = sphi 0, %s105
    %s108 = sphi 0, %s107
    %s122 = sphi 0, %s108
    %s130 = sphi 0, %s132
    %s133 = sphi 0, %s130
    %s134 = sphi 0, %s133
    %s150 = sphi 0, %s134
  $region4: #{fourier_basis_trf_forward.1} parent=0 // loop_header_branch
    %13 = sbr.rel (%p11) target = $region8
  $region5: #{fourier_basis_trf_forward.1} parent=0 // loop_body
    %s15 = ssub.s32 %s10, 1
    %s16 = ssub.s32 %s10, 2
    %s23 = sadd.s32 1, %s18
    %p24 = scmp.ge.s32.totalorder %s23, 1
    %s25 = scalar_select %p24, 0, %s23
    %s26 = sadd.s32 1, %s17
    %s27 = scalar_select %p24, %s26, %s17
    %p28 = scmp.ge.s32.totalorder %s27, 2
    %s29 = scalar_select %p28, 0, %s27
    %s30 = ssub.s32 %s18, %s25
    %p31 = scmp.eq.s32.totalorder %s30, 0
    %s33 = sadd.s32 %s32, 1
    %s34 = scalar_select %p31, %s32, %s33
    %p37 = pneg %p31
    %p38 = scmp.eq.s32.totalorder %s10, 1
    %p39 = por %p37, %p38
    %p40 = scmp.ne.s32.totalorder %s32, %s35
    %p41 = scmp.eq.s32.totalorder %s10, 0
    %p42 = por %p40, %p41
    %p43 = scmp.ne.s32.totalorder %s32, %s35
    %p44 = scmp.eq.s32.totalorder %s15, 1
    %p45 = por %p43, %p44
    %p46 = scmp.ne.s32.totalorder %s35, %s36
    %p47 = scmp.eq.s32.totalorder %s15, 0
    %p48 = por %p46, %p47
    %p49 = scmp.ne.s32.totalorder %s35, %s36
    %p50 = scmp.eq.s32.totalorder %s16, 1
    %p51 = por %p49, %p50
    %p53 = scmp.ne.s32.totalorder %s36, %s52
    %p54 = scmp.eq.s32.totalorder %s16, 0
    %p55 = por %p53, %p54
    %s56 = ssub.s32 %s17, %s29
    %s57 = ssub.s32 %s18, %s25
    %s58 = sor.u32 %s56, %s57
    %p59 = scmp.eq.s32.totalorder %s58, 0
    %s61 = sadd.s32 %s60, 1
    %s62 = scalar_select %p59, %s60, %s61
    %p65 = pneg %p59
    %p66 = scmp.eq.s32.totalorder %s10, 1
    %p67 = por %p65, %p66
    %p68 = scmp.ne.s32.totalorder %s60, %s63
    %p69 = scmp.eq.s32.totalorder %s10, 0
    %p70 = por %p68, %p69
    %p71 = scmp.ne.s32.totalorder %s60, %s63
    %p72 = scmp.eq.s32.totalorder %s15, 1
    %p73 = por %p71, %p72
    %p74 = scmp.ne.s32.totalorder %s63, %s64
    %p75 = scmp.eq.s32.totalorder %s15, 0
    %p76 = por %p74, %p75
    %p77 = scmp.ne.s32.totalorder %s63, %s64
    %p78 = scmp.eq.s32.totalorder %s16, 1
    %p79 = por %p77, %p78
    %p81 = scmp.ne.s32.totalorder %s64, %s80
    %p82 = scmp.eq.s32.totalorder %s16, 0
    %p83 = por %p81, %p82
    %s85 = sadd.s32 %s84, 1
    %p88 = scmp.eq.s32.totalorder %s10, 1
    %p89 = scmp.ne.s32.totalorder %s84, %s86
    %p90 = scmp.eq.s32.totalorder %s10, 0
    %p91 = por %p89, %p90
    %p92 = scmp.ne.s32.totalorder %s84, %s86
    %p93 = scmp.eq.s32.totalorder %s15, 1
    %p94 = por %p92, %p93
    %p95 = scmp.ne.s32.totalorder %s86, %s87
    %p96 = scmp.eq.s32.totalorder %s15, 0
    %p97 = por %p95, %p96
    %p98 = scmp.ne.s32.totalorder %s86, %s87
    %p99 = scmp.eq.s32.totalorder %s16, 1
    %p100 = por %p98, %p99
    %p102 = scmp.ne.s32.totalorder %s87, %s101
    %p103 = scmp.eq.s32.totalorder %s16, 0
    %p104 = por %p102, %p103
    %s106 = sadd.s32 %s105, 1
    %p109 = scmp.eq.s32.totalorder %s10, 1
    %p110 = scmp.ne.s32.totalorder %s105, %s107
    %p111 = scmp.eq.s32.totalorder %s10, 0
    %p112 = por %p110, %p111
    %p113 = scmp.ne.s32.totalorder %s105, %s107
    %p114 = scmp.eq.s32.totalorder %s15, 1
    %p115 = por %p113, %p114
    %p116 = scmp.ne.s32.totalorder %s107, %s108
    %p117 = scmp.eq.s32.totalorder %s15, 0
    %p118 = por %p116, %p117
    %p119 = scmp.ne.s32.totalorder %s107, %s108
    %p120 = scmp.eq.s32.totalorder %s16, 1
    %p121 = por %p119, %p120
    %p123 = scmp.ne.s32.totalorder %s108, %s122
    %p124 = scmp.eq.s32.totalorder %s16, 0
    %p125 = por %p123, %p124
    %s126 = ssub.s32 %s17, %s29
    %s127 = ssub.s32 %s18, %s25
    %s128 = sor.u32 %s126, %s127
    %p129 = scmp.eq.s32.totalorder %s128, 0
    %s131 = sadd.s32 %s130, 1
    %s132 = scalar_select %p129, %s130, %s131
    %p135 = pneg %p129
    %p136 = scmp.eq.s32.totalorder %s10, 1
    %p137 = por %p135, %p136
    %p138 = scmp.ne.s32.totalorder %s130, %s133
    %p139 = scmp.eq.s32.totalorder %s10, 0
    %p140 = por %p138, %p139
    %p141 = scmp.ne.s32.totalorder %s130, %s133
    %p142 = scmp.eq.s32.totalorder %s15, 1
    %p143 = por %p141, %p142
    %p144 = scmp.ne.s32.totalorder %s133, %s134
    %p145 = scmp.eq.s32.totalorder %s15, 0
    %p146 = por %p144, %p145
    %p147 = scmp.ne.s32.totalorder %s133, %s134
    %p148 = scmp.eq.s32.totalorder %s16, 1
    %p149 = por %p147, %p148
    %p151 = scmp.ne.s32.totalorder %s134, %s150
    %p152 = scmp.eq.s32.totalorder %s16, 0
    %p153 = por %p151, %p152
    %p154 = scmp.le.s32.totalorder 1, %s10
    %p155 = scmp.lt.s32.totalorder %s10, 3
    %p156 = pnand %p154, %p155
    %p157 = pneg %p156
    // Predicated region
    $region9: #{fourier_basis_trf_forward.1} parent=5 // pred_check
      _
    $region10: #{fourier_basis_trf_forward.1} parent=5 // pred_check_branch
      %159 = sbr.rel (%p156) target = $region12
    $region11: #{fourier_basis_trf_forward.1} parent=5 // pred_region
      %s160 = ssub.s32 %s10, 1
      // Predicated region
      $region13: #{fourier_basis_trf_forward.1} parent=11 // pred_check
        %p161 = pneg %p48
      $region14: #{fourier_basis_trf_forward.1} parent=11 // pred_check_branch
        %163 = sbr.rel (%p161) target = $region16
      $region15: #{fourier_basis_trf_forward.1} parent=11 // pred_region
        %p164 = scmp.lt.s32.totalorder %s20, 0
        %s165 = scalar_select %p164, %s20, 0
        %s166 = scalar_lea.vmem %s0, %s165
      $region16: #{fourier_basis_trf_forward.1} parent=11 // pred_fallthru
        _
      // Predicated region
      $region17: #{fourier_basis_trf_forward.1} parent=11 // pred_check
        %p167 = pneg %p97
      $region18: #{fourier_basis_trf_forward.1} parent=11 // pred_check_branch
        %169 = sbr.rel (%p167) target = $region20
      $region19: #{fourier_basis_trf_forward.1} parent=11 // pred_region
        _
      $region20: #{fourier_basis_trf_forward.1} parent=11 // pred_fallthru
        _
      // Predicated region
      $region21: #{fourier_basis_trf_forward.1} parent=11 // pred_check
        %p170 = pneg %p118
      $region22: #{fourier_basis_trf_forward.1} parent=11 // pred_check_branch
        %172 = sbr.rel (%p170) target = $region24
      $region23: #{fourier_basis_trf_forward.1} parent=11 // pred_region
        _
      $region24: #{fourier_basis_trf_forward.1} parent=11 // pred_fallthru
        _
    $region12: #{fourier_basis_trf_forward.1} parent=5 // pred_fallthru
      _
    %p173 = scmp.lt.s32.totalorder %s10, 2
    // Predicated region
    $region25: #{fourier_basis_trf_forward.1} parent=5 // pred_check
      %p174 = pneg %p173
    $region26: #{fourier_basis_trf_forward.1} parent=5 // pred_check_branch
      %176 = sbr.rel (%p174) target = $region28
    $region27: #{fourier_basis_trf_forward.1} parent=5 // pred_region
      // Predicated region
      $region29: #{fourier_basis_trf_forward.1} parent=27 // pred_check
        %p177 = pneg %p70
      $region30: #{fourier_basis_trf_forward.1} parent=27 // pred_check_branch
        %179 = sbr.rel (%p177) target = $region32
      $region31: #{fourier_basis_trf_forward.1} parent=27 // pred_region
        %p180 = scmp.lt.s32.totalorder %s17, 1
        %s181 = scalar_select %p180, %s17, 1
        %p182 = scmp.lt.s32.totalorder %s18, 0
        %s183 = scalar_select %p182, %s18, 0
        %s184 = sadd.s32 %s183, %s181
        %s185 = smul.addr %s184, 4
        %s186 = scalar_lea.vmem %s1, %s185
      $region32: #{fourier_basis_trf_forward.1} parent=27 // pred_fallthru
        _
    $region28: #{fourier_basis_trf_forward.1} parent=5 // pred_fallthru
      _
    %p187 = scmp.le.s32.totalorder 1, %s10
    %p188 = scmp.lt.s32.totalorder %s10, 3
    %p189 = pnand %p187, %p188
    %p190 = pneg %p189
    // Predicated region
    $region33: #{fourier_basis_trf_forward.1} parent=5 // pred_check
      _
    $region34: #{fourier_basis_trf_forward.1} parent=5 // pred_check_branch
      %192 = sbr.rel (%p189) target = $region36
    $region35: #{fourier_basis_trf_forward.1} parent=5 // pred_region
      %s193 = ssub.s32 %s10, 1
      %p194 = scmp.lt.s32.totalorder %s20, 0
      %s195 = scalar_select %p194, %s20, 0
      %s196 = scalar_lea.vmem %s0, %s195
      %p197 = pneg %p48
      %p198 = pneg %p45
      %p199 = scmp.lt.s32.totalorder %s19, 1
      %s200 = scalar_select %p199, %s19, 1
      %p201 = scmp.lt.s32.totalorder %s20, 0
      %s202 = scalar_select %p201, %s20, 0
      %s203 = sadd.s32 %s202, %s200
      %s204 = smul.addr %s203, 4
      %s205 = scalar_lea.vmem %s1, %s204
      %p206 = pneg %p76
      %p207 = pneg %p73
      %p208 = pneg %p97
      %p209 = pneg %p94
      %p210 = pneg %p118
      %p211 = pneg %p115
      %p212 = pneg %p146
      %p213 = pneg %p143
      %p214 = scmp.lt.s32.totalorder %s19, 1
      %s215 = scalar_select %p214, %s19, 1
      %p216 = scmp.lt.s32.totalorder %s20, 0
      %s217 = scalar_select %p216, %s20, 0
      %s218 = sadd.s32 %s217, %s215
      %s219 = smul.addr %s218, 8
      %s220 = scalar_lea.vmem %s4, %s219
      %p221 = scmp.lt.s32.totalorder %s20, 0
      %s222 = scalar_select %p221, %s20, 0
      %s223 = scalar_lea.vmem %s0, %s222
      %p224 = scmp.lt.s32.totalorder %s19, 1
      %s225 = scalar_select %p224, %s19, 1
      %p226 = scmp.lt.s32.totalorder %s20, 0
      %s227 = scalar_select %p226, %s20, 0
      %s228 = sadd.s32 %s227, %s225
      %s229 = smul.addr %s228, 4
      %s230 = scalar_lea.vmem %s1, %s229
      %p231 = scmp.lt.s32.totalorder %s19, 1
      %s232 = scalar_select %p231, %s19, 1
      %p233 = scmp.lt.s32.totalorder %s20, 0
      %s234 = scalar_select %p233, %s20, 0
      %s235 = sadd.s32 %s234, %s232
      %s236 = smul.addr %s235, 8
      %s237 = scalar_lea.vmem %s4, %s236
      %v238 = vld [vmem:[%s230] sm:$0x7]
      %v239 = vld [vmem:[%s223] sm:$0x1]
      %v242 = vunpack.c.l.s4 1966171168
      %v243 = vunpack.c.0.s8 %v242
      %v244 = vlaneseq
      %v245 = vshrl.u32 %v244, 7
      %v246 = vsub.s32 %v243, %v245
      %v247 = vrot.slane %v238, %v246
      %v248 = vcombine.high %v247, %v247
      %v250 = vunpack.c.l.s4 1966171168
      %v251 = vunpack.c.0.s8 %v250
      %v252 = vlaneseq
      %v253 = vshrl.u32 %v252, 7
      %v254 = vsub.s32 %v251, %v253
      %v255 = vrot.slane %v248, %v254
      %v257 = vsub.f32 %v239, %v255
      %v259 = vlaneseq
      %v260 = vshrl.u32 %v259, 7
      %v261 = vsub.s32 0, %v260
      %v262 = vrot.slane %v257, %v261
      %v264 = vmul.f32 %v238, %v262
      %v265 = vand.u32 2147483647, %v264
      %vm266 = vcmp.le.f32.partialorder %v265, 0.7853982
      %vm267 = vcmp.lt.s32.totalorder %v264, 0
      %v268 = vand.u32 %v264, 2139095040
      %v269 = vshrl.u32 %v268, 23
      %v270 = vsub.s32 %v269, 127
      %v271 = vand.u32 2147483647, %v264
      %v272 = vand.u32 %v271, 8388607
      %v273 = vor.u32 %v272, 8388608
      %v274 = vsub.s32 0, %v273
      %v275 = vadd.s32 %v270, 1
      %vm276 = vcmp.gt.s32.totalorder %v275, 0
      %v277 = vsel %vm276, %v275, 0
      %v278 = vshrl.u32 %v277, 5
      %v279 = vand.u32 %v277, 31
      %v280 = vsub.s32 32, %v279
      %v281 = vshrl.u32 683565275, %v280
      %v282 = vshll.u32 683565275, %v279
      %v283 = vshrl.u32 2475754826, %v280
      %v284 = vor.u32 %v282, %v283
      %v285 = vshll.u32 2475754826, %v279
      %v286 = vshrl.u32 2131351028, %v280
      %v287 = vor.u32 %v285, %v286
      %v288 = vshll.u32 2131351028, %v279
      %v289 = vshrl.u32 2102212464, %v280
      %v290 = vor.u32 %v288, %v289
      %v291 = vshll.u32 2102212464, %v279
      %v292 = vshrl.u32 920167782, %v280
      %v293 = vor.u32 %v291, %v292
      %v294 = vshll.u32 920167782, %v279
      %v295 = vshrl.u32 1326507024, %v280
      %v296 = vor.u32 %v294, %v295
      %vm297 = vcmp.lt.s32.totalorder %v278, 1
      %vm298 = vcmp.lt.s32.totalorder %v278, 2
      %vm299 = vcmp.lt.s32.totalorder %v278, 3
      %vm300 = vcmp.lt.s32.totalorder %v278, 4
      %v301 = vsel %vm297, %v281, %v284
      %v302 = vsel %vm300, %v290, 2102212464
      %v303 = vsel %vm299, %v287, %v302
      %v304 = vsel %vm298, %v301, %v303
      %v305 = vsel %vm297, %v284, %v287
      %v306 = vsel %vm300, %v293, 920167782
      %v307 = vsel %vm299, %v290, %v306
      %v308 = vsel %vm298, %v305, %v307
      %v309 = vsel %vm297, %v287, %v290
      %v310 = vsel %vm300, %v296, 1326507024
      %v311 = vsel %vm299, %v293, %v310
      %v312 = vsel %vm298, %v309, %v311
      %v313 = vshll.u32 %v273, 8
      %v314 = vmul.u32.u64.compose %v313, %v312
      %v315 = vextract.low.u32 %v314
      %v316 = vextract.high.u32 %v314
      %v317 = vmul.u32.u64.compose %v313, %v308
      %v318 = vextract.low.u32 %v317
      %v319 = vextract.high.u32 %v317
      %v320 = vmul.u32 %v313, %v304
      %v321 = vadd.s32 %v316, %v318
      %vm322 = vc.u32 %v316, %v318
      %v323 = vadd.s32 %v319, 1
      %v324 = vsel %vm322, %v323, %v319
      %v325 = vadd.s32 %v320, %v324
      %v326 = vadd.s32 %v325, 536870912
      %v327 = vshrl.u32 %v326, 30
      %v328 = vshll.u32 %v327, 30
      %v329 = vsub.s32 %v325, %v328
      %vm330 = vcmp.lt.s32.totalorder %v329, 0
      %v331 = vsub.s32 0, %v329
      %v332 = vsel %vm330, %v331, %v329
      %v333 = vclz %v332
      %v334 = vsub.s32 %v333, 2
      %vm335 = vcmp.gt.s32.totalorder 0, %v334
      %v336 = vsel %vm335, 0, %v334
      %v337 = vsub.s32 32, %v336
      %v338 = vshll.u32 %v329, %v336
      %v339 = vshrl.u32 %v321, %v337
      %v340 = vor.u32 %v338, %v339
      %v341 = vsub.s32 4294967266, %v336
      %v342 = vadd.s32 %v341, 127
      %v343 = vshll.u32 %v342, 23
      %v344 = vor.u32 4788187, %v343
      %v345 = vand.u32 2147483647, %v344
      %v347 = vcvt.s32.f32 %v340
      %v348 = vmul.f32 %v347, %v345
      %v349 = vxor.u32 %v348, 2147483648
      %v350 = vsel %vm267, %v349, %v348
      %v351 = vsub.s32 4, %v327
      %v352 = vsel %vm267, %v351, %v327
      %v353 = vsel %vm266, %v264, %v350
      %v354 = vsel %vm266, 0, %v352
      %v355 = vcosq.f32.pop %v353
      %v356 = vsinq.f32.pop %v353
      %vm357 = vweird.f32 %v264
      %v358 = vadd.s32 %v354, 3
      %v359 = vand.u32 %v358, 3
      %vm360 = vcmp.lt.s32.totalorder %v359, 2
      %vm361 = vcmp.eq.s32.totalorder %v359, 0
      %v362 = vxor.u32 %v356, 2147483648
      %v363 = vsel %vm361, %v355, %v362
      %vm364 = vcmp.eq.s32.totalorder %v359, 2
      %v365 = vxor.u32 %v355, 2147483648
      %v366 = vsel %vm364, %v365, %v356
      %v367 = vsel %vm360, %v363, %v366
      %v368 = vsel %vm357, nan, %v367
      %v369 = vand.u32 2147483647, %v264
      %vm370 = vcmp.le.f32.partialorder %v369, 0.7853982
      %vm371 = vcmp.lt.s32.totalorder %v264, 0
      %v372 = vand.u32 %v264, 2139095040
      %v373 = vshrl.u32 %v372, 23
      %v374 = vsub.s32 %v373, 127
      %v375 = vand.u32 2147483647, %v264
      %v376 = vand.u32 %v375, 8388607
      %v377 = vor.u32 %v376, 8388608
      %v378 = vsub.s32 0, %v377
      %v379 = vadd.s32 %v374, 1
      %vm380 = vcmp.gt.s32.totalorder %v379, 0
      %v381 = vsel %vm380, %v379, 0
      %v382 = vshrl.u32 %v381, 5
      %v383 = vand.u32 %v381, 31
      %v384 = vsub.s32 32, %v383
      %v385 = vshrl.u32 683565275, %v384
      %v386 = vshll.u32 683565275, %v383
      %v387 = vshrl.u32 2475754826, %v384
      %v388 = vor.u32 %v386, %v387
      %v389 = vshll.u32 2475754826, %v383
      %v390 = vshrl.u32 2131351028, %v384
      %v391 = vor.u32 %v389, %v390
      %v392 = vshll.u32 2131351028, %v383
      %v393 = vshrl.u32 2102212464, %v384
      %v394 = vor.u32 %v392, %v393
      %v395 = vshll.u32 2102212464, %v383
      %v396 = vshrl.u32 920167782, %v384
      %v397 = vor.u32 %v395, %v396
      %v398 = vshll.u32 920167782, %v383
      %v399 = vshrl.u32 1326507024, %v384
      %v400 = vor.u32 %v398, %v399
      %vm401 = vcmp.lt.s32.totalorder %v382, 1
      %vm402 = vcmp.lt.s32.totalorder %v382, 2
      %vm403 = vcmp.lt.s32.totalorder %v382, 3
      %vm404 = vcmp.lt.s32.totalorder %v382, 4
      %v405 = vsel %vm401, %v385, %v388
      %v406 = vsel %vm404, %v394, 2102212464
      %v407 = vsel %vm403, %v391, %v406
      %v408 = vsel %vm402, %v405, %v407
      %v409 = vsel %vm401, %v388, %v391
      %v410 = vsel %vm404, %v397, 920167782
      %v411 = vsel %vm403, %v394, %v410
      %v412 = vsel %vm402, %v409, %v411
      %v413 = vsel %vm401, %v391, %v394
      %v414 = vsel %vm404, %v400, 1326507024
      %v415 = vsel %vm403, %v397, %v414
      %v416 = vsel %vm402, %v413, %v415
      %v417 = vshll.u32 %v377, 8
      %v418 = vmul.u32.u64.compose %v417, %v416
      %v419 = vextract.low.u32 %v418
      %v420 = vextract.high.u32 %v418
      %v421 = vmul.u32.u64.compose %v417, %v412
      %v422 = vextract.low.u32 %v421
      %v423 = vextract.high.u32 %v421
      %v424 = vmul.u32 %v417, %v408
      %v425 = vadd.s32 %v420, %v422
      %vm426 = vc.u32 %v420, %v422
      %v427 = vadd.s32 %v423, 1
      %v428 = vsel %vm426, %v427, %v423
      %v429 = vadd.s32 %v424, %v428
      %v430 = vadd.s32 %v429, 536870912
      %v431 = vshrl.u32 %v430, 30
      %v432 = vshll.u32 %v431, 30
      %v433 = vsub.s32 %v429, %v432
      %vm434 = vcmp.lt.s32.totalorder %v433, 0
      %v435 = vsub.s32 0, %v433
      %v436 = vsel %vm434, %v435, %v433
      %v437 = vclz %v436
      %v438 = vsub.s32 %v437, 2
      %vm439 = vcmp.gt.s32.totalorder 0, %v438
      %v440 = vsel %vm439, 0, %v438
      %v441 = vsub.s32 32, %v440
      %v442 = vshll.u32 %v433, %v440
      %v443 = vshrl.u32 %v425, %v441
      %v444 = vor.u32 %v442, %v443
      %v445 = vsub.s32 4294967266, %v440
      %v446 = vadd.s32 %v445, 127
      %v447 = vshll.u32 %v446, 23
      %v448 = vor.u32 4788187, %v447
      %v449 = vand.u32 2147483647, %v448
      %v451 = vcvt.s32.f32 %v444
      %v452 = vmul.f32 %v451, %v449
      %v453 = vxor.u32 %v452, 2147483648
      %v454 = vsel %vm371, %v453, %v452
      %v455 = vsub.s32 4, %v431
      %v456 = vsel %vm371, %v455, %v431
      %v457 = vsel %vm370, %v264, %v454
      %v458 = vsel %vm370, 0, %v456
      %v459 = vcosq.f32.pop %v457
      %v460 = vsinq.f32.pop %v457
      %vm461 = vweird.f32 %v264
      %v462 = vand.u32 %v458, 3
      %vm463 = vcmp.lt.s32.totalorder %v462, 2
      %vm464 = vcmp.eq.s32.totalorder %v462, 0
      %v465 = vxor.u32 %v460, 2147483648
      %v466 = vsel %vm464, %v459, %v465
      %vm467 = vcmp.eq.s32.totalorder %v462, 2
      %v468 = vxor.u32 %v459, 2147483648
      %v469 = vsel %vm467, %v468, %v460
      %v470 = vsel %vm463, %v466, %v469
      %v471 = vsel %vm461, nan, %v470
      %v473 = vrot.slane %v368, 2
      %v476 = vrot.slane %v471, 1
      %vm478 = vcmask 1040384
      %v479 = vsel %vm478, %v473, %v476
      %v480 = vsel %vm478, 0.0, 1.0
      %v481 = vmul.f32 %v471, 2.0
      %v482 = vlaneseq
      %v483 = vshrl.u32 %v482, 7
      %v484 = vsub.s32 2, %v483
      %v485 = vrot.slane %v481, %v484
      %v486 = vmul.f32 %v485, %v479
      %v487 = vsub.f32 %v486, %v480
      %v488 = vmul.f32 %v485, %v487
      %v489 = vsub.f32 %v488, %v479
      %v490 = vmul.f32 %v485, %v489
      %v491 = vsub.f32 %v490, %v487
      %v493 = vrot.slane %v487, 6
      %v496 = vrot.slane %v489, 4
      %v499 = vrot.slane %v491, 2
      %vm501 = vcmask 1041408
      %v502 = vsel %vm501, %v479, %v493
      %vm503 = vcmask 1043456
      %v504 = vsel %vm503, %v502, %v496
      %vm505 = vcmask 1045504
      %v506 = vsel %vm505, %v504, %v499
      %v507 = vld [vmem:[%s2] sm:$0xff]
      %v508 = vld [vmem:[%s3] sm:$0xff]
      %510 = vset.pattern.permute.xlu0 0
      %511 = vperm.xlu0 %510, %v508
      %v512 = vpop.permute.xlu0 %511
      %vm514 = vcmask 64512
      %v516 = vsel %vm514, %v507, 0
      %518 = vmatprep.subr.mxu0 0.0
      %519 = vmatpush1.msra.mxu0 %v506
      %520 = vmatprep.subr.mxu0 0.0
      %521 = vmatpush1.msra.mxu0 0.0
      %522 = vmatprep.subr.mxu0 0.0
      %523 = vmatpush1.msra.mxu0 0.0
      %524 = vmatprep.subr.mxu0 0.0
      %525 = vmatpush1.msra.mxu0 0.0
      %526 = vmatprep.subr.mxu0 0.0
      %527 = vmatpush1.msra.mxu0 0.0
      %528 = vmatprep.subr.mxu0 0.0
      %529 = vmatpush1.msra.mxu0 0.0
      %530 = vmatprep.subr.mxu0 0.0
      %531 = vmatpush1.msra.mxu0 0.0
      %532 = vmatprep.subr.mxu0 0.0
      %533 = vmatpush1.msra.mxu0 0.0
      %534 = vmatprep.subr.mxu0 0.0
      %535 = vmatpush1.msra.mxu0 0.0
      %536 = vmatprep.subr.mxu0 0.0
      %537 = vmatpush1.msra.mxu0 0.0
      %538 = vmatprep.subr.mxu0 0.0
      %539 = vmatpush1.msra.mxu0 0.0
      %540 = vmatprep.subr.mxu0 0.0
      %541 = vmatpush1.msra.mxu0 0.0
      %542 = vmatprep.subr.mxu0 0.0
      %543 = vmatpush1.msra.mxu0 0.0
      %544 = vmatprep.subr.mxu0 0.0
      %545 = vmatpush1.msra.mxu0 0.0
      %546 = vmatprep.subr.mxu0 0.0
      %547 = vmatpush1.msra.mxu0 0.0
      %548 = vmatprep.subr.mxu0 0.0
      %549 = vmatpush1.msra.mxu0 0.0
      %550 = vmatprep.subr.mxu0 0.0
      %551 = vmatpush1.msra.mxu0 0.0
      %552 = vmatprep.subr.mxu0 0.0
      %553 = vmatpush1.msra.mxu0 0.0
      %554 = vmatprep.subr.mxu0 0.0
      %555 = vmatpush1.msra.mxu0 0.0
      %556 = vmatprep.subr.mxu0 0.0
      %557 = vmatpush1.msra.mxu0 0.0
      %558 = vmatprep.subr.mxu0 0.0
      %559 = vmatpush1.msra.mxu0 0.0
      %560 = vmatprep.subr.mxu0 0.0
      %561 = vmatpush1.msra.mxu0 0.0
      %562 = vmatprep.subr.mxu0 0.0
      %563 = vmatpush1.msra.mxu0 0.0
      %564 = vmatprep.subr.mxu0 0.0
      %565 = vmatpush1.msra.mxu0 0.0
      %566 = vmatprep.subr.mxu0 0.0
      %567 = vmatpush1.msra.mxu0 0.0
      %568 = vmatprep.subr.mxu0 0.0
      %569 = vmatpush1.msra.mxu0 0.0
      %570 = vmatprep.subr.mxu0 0.0
      %571 = vmatpush1.msra.mxu0 0.0
      %572 = vmatprep.subr.mxu0 0.0
      %573 = vmatpush1.msra.mxu0 0.0
      %574 = vmatprep.subr.mxu0 0.0
      %575 = vmatpush1.msra.mxu0 0.0
      %576 = vmatprep.subr.mxu0 0.0
      %577 = vmatpush1.msra.mxu0 0.0
      %578 = vmatprep.subr.mxu0 0.0
      %579 = vmatpush1.msra.mxu0 0.0
      %580 = vmatprep.subr.mxu0 0.0
      %581 = vmatpush1.msra.mxu0 0.0
      %582 = vmatprep.mubr.f32.mxu0 0.0
      %583 = vmatmul.mubr.f32.gmra.mrb[0].mxu0 %v516
      %v584 = vpop.f32.mrb[0].mxu0
      %v585 = vadd.f32 %v512, %v584
      %v586 = vpop.f32.mrb[0].mxu0
      %587 = vdwg.mxu0
      %v588 = vlaneseq
      %v589 = vshrl.u32 %v588, 7
      %v590 = vsub.s32 0, %v589
      %v591 = vrot.slane %v238, %v590
      %v592 = vmul.f32 %v591, %v585
      %593 = vst [vmem:[%s237] sm:$0xff] %v592
      %p594 = scmp.lt.s32.totalorder %s19, 1
      %s595 = scalar_select %p594, %s19, 1
      %p596 = scmp.lt.s32.totalorder %s20, 0
      %s597 = scalar_select %p596, %s20, 0
      %s598 = sadd.s32 %s597, %s595
      %s599 = smul.addr %s598, 8
      %s600 = scalar_lea.vmem %s4, %s599
      // Predicated region
      $region37: #{fourier_basis_trf_forward.1} parent=35 // pred_check
        %p601 = pneg %p143
      $region38: #{fourier_basis_trf_forward.1} parent=35 // pred_check_branch
        %603 = sbr.rel (%p601) target = $region40
      $region39: #{fourier_basis_trf_forward.1} parent=35 // pred_region
        _
      $region40: #{fourier_basis_trf_forward.1} parent=35 // pred_fallthru
        _
    $region36: #{fourier_basis_trf_forward.1} parent=5 // pred_fallthru
      _
    %p604 = scmp.le.s32.totalorder 2, %s10
    // Predicated region
    $region41: #{fourier_basis_trf_forward.1} parent=5 // pred_check
      %p605 = pneg %p604
    $region42: #{fourier_basis_trf_forward.1} parent=5 // pred_check_branch
      %607 = sbr.rel (%p605) target = $region44
    $region43: #{fourier_basis_trf_forward.1} parent=5 // pred_region
      %s608 = ssub.s32 %s10, 2
      // Predicated region
      $region45: #{fourier_basis_trf_forward.1} parent=43 // pred_check
        %p609 = pneg %p149
      $region46: #{fourier_basis_trf_forward.1} parent=43 // pred_check_branch
        %611 = sbr.rel (%p609) target = $region48
      $region47: #{fourier_basis_trf_forward.1} parent=43 // pred_region
        %p612 = scmp.lt.s32.totalorder %s21, 1
        %s613 = scalar_select %p612, %s21, 1
        %p614 = scmp.lt.s32.totalorder %s22, 0
        %s615 = scalar_select %p614, %s22, 0
        %s616 = sadd.s32 %s615, %s613
        %s617 = smul.addr %s616, 8
        %s618 = scalar_lea.vmem %s4, %s617
      $region48: #{fourier_basis_trf_forward.1} parent=43 // pred_fallthru
        _
    $region44: #{fourier_basis_trf_forward.1} parent=5 // pred_fallthru
      _
  $region6: #{fourier_basis_trf_forward.1} parent=0 // loop_footer
    %s14 = sadd.s32 1, %s10
  $region7: #{fourier_basis_trf_forward.1} parent=0 // loop_footer_branch
    %9 = sbr.rel target = $region3
  $region8: #{fourier_basis_trf_forward.1} parent=0 // loop_exit
    _

</llo_original>
